<compile_context>
chip_gen: v6e
topology: v6e:2x2x1
jax: 0.10.0
libtpu: 0.0.40
codegen_flags: <defaults>
</compile_context>

<pallas_src>
import jax
import jax.numpy as jnp
from jax.experimental import pallas as pl
from jax.experimental.pallas import tpu as pltpu

K_DIM = 16384   # fixed by the module: nn.Parameter(randn(16384, 2))
N_DIM = 2


def netv1_kernel(x_ref, wd_ref, o_ref):
    """One batch tile.

    x_ref : (tb, K) f32  activation tile (streamed from HBM)
    wd_ref: (1,  K) f32  lane-dense weight-difference row  W[:,0] - W[:,1]
    o_ref : (tb, 2) f32  per-row softmax [p0, p1]
    """
    x = x_ref[...]                                   # (tb, K)
    wd = wd_ref[...]                                 # (1, K), sublane-broadcasts
    # d = h0 - h1 = x @ (W[:,0] - W[:,1]): VPU mul + XLU lane reduction,
    # hidden under the x-tile DMA of this mem-bound kernel.
    d = jnp.sum(x * wd, axis=-1, keepdims=True)      # (tb, 1) f32
    # 2-way softmax == [sigmoid(d), sigmoid(-d)].
    col = jax.lax.broadcasted_iota(jnp.int32, o_ref.shape, dimension=1)
    sign = jnp.where(col == 0, 1.0, -1.0)            # (tb, 2): +1 col 0, -1 col 1
    z = d * sign                                     # (tb, 2) = [d, -d]
    o_ref[...] = (1.0 / (1.0 + jnp.exp(-z))).astype(o_ref.dtype)


def prepare_netv1_weights(w):
    """One-time weight prep (call at init, not per forward).

    W (K, 2) -> lane-dense difference row (1, K).  Hoisting this out of the
    forward avoids an extra XLA transpose/sub kernel + HBM round trip per call.
    """
    assert w.shape == (K_DIM, N_DIM), "module fixes W to (16384, 2)"
    return (w[:, 0] - w[:, 1]).reshape(1, K_DIM).astype(jnp.float32)


def _pick_tb(B):
    """Batch tile size.

    * B < 16: single small step (megacore split not worth the overhead).
    * B >= 16: ~half the batch, sublane-aligned, capped at 128 rows so the
      x tile is 8 MiB (double-buffered 16 MiB -> fits the raised scoped VMEM
      limit on v5e/v6e and v7x's 64 MiB physical VMEM), and the grid has
      >= 2 steps so "parallel" actually shards across v7x's 2 TensorCores.
    """
    if B < 16:
        return max(B, 1)
    half = (B // 2) // 8 * 8
    return max(8, min(128, half))


def netv1_forward(x, w_diff, *, tb=None):
    """x: (B, K) f32, w_diff: (1, K) f32 (from prepare_netv1_weights)."""
    B, K = x.shape
    assert K == K_DIM, "feature dim fixed at 16384 by the module"
    assert w_diff.shape == (1, K_DIM)

    if tb is None:
        tb = _pick_tb(B)

    # Pad the batch to a multiple of the tile instead of rejecting it.
    Bp = ((B + tb - 1) // tb) * tb
    x_p = x if Bp == B else jnp.pad(x, ((0, Bp - B), (0, 0)))

    out = pl.pallas_call(
        netv1_kernel,
        out_shape=jax.ShapeDtypeStruct((Bp, N_DIM), jnp.float32),
        grid_spec=pltpu.PrefetchScalarGridSpec(
            num_scalar_prefetch=0,
            grid=(Bp // tb,),
            in_specs=[
                pl.BlockSpec((tb, K), lambda b: (b, 0)),    # x batch tile, full K
                pl.BlockSpec((1, K), lambda b: (0, 0)),     # resident w_diff row
            ],
            out_specs=pl.BlockSpec((tb, N_DIM), lambda b: (b, 0)),
        ),
        compiler_params=pltpu.CompilerParams(
            # Batch axis is independent -> megacore-shardable on v7x.
            dimension_semantics=("parallel",),
            # Raise the scoped VMEM limit above the 16/32 MiB defaults so the
            # 2 x 8 MiB double-buffered x tiles fit; 48 MiB leaves headroom
            # under v7x's 64 MiB physical VMEM (v5e/v6e have 128 MiB).
            vmem_limit_bytes=48 * 1024 * 1024,
        ),
        cost_estimate=pl.CostEstimate(
            flops=2 * Bp * K,              # mul + add per (row, feature)
            transcendentals=2 * Bp,        # one exp per output element
            bytes_accessed=4 * (Bp * K + K + Bp * N_DIM),
        ),
    )(x_p, w_diff)

    return out if Bp == B else out[:B]


if __name__ == "__main__":
    key = jax.random.PRNGKey(0)
    kx, kw = jax.random.split(key)

    B = 8  # small batch; feature dim fixed at 16384 by the module's W shape
    # Scale x so logits (dot products of 16384 standard normals, std ~128)
    # stay well inside exp's f32 range: keeps the *faithful naive* PyTorch
    # reference (exp without any stabilization) finite for the comparison.
    x = jax.random.normal(kx, (B, K_DIM), dtype=jnp.float32) * 0.01
    # Deterministic synthetic parameter (stands in for nn.Parameter(randn(16384, 2)))
    W = jax.random.normal(kw, (K_DIM, N_DIM), dtype=jnp.float32)

    w_diff = prepare_netv1_weights(W)          # one-time, init-style weight prep
    out = jax.block_until_ready(netv1_forward(x, w_diff))

    # Pure-JAX reference: same math as the PyTorch forward (naive exp/sum/div).
    logits_ref = jnp.matmul(x, W, precision=jax.lax.Precision.HIGHEST)
    h_ref = jnp.exp(logits_ref)
    ref = h_ref / jnp.sum(h_ref, axis=1, keepdims=True)

    assert out.shape == (B, N_DIM)
    assert bool(jnp.all(jnp.isfinite(out)))
    assert jnp.allclose(out, ref, atol=1e-4, rtol=1e-4)

    print("KERNEL_OK")
</pallas_src>

<mosaic_0001>
module attributes {stable_mosaic.version = 11 : i64} {
  func.func @netv1_kernel(%arg0: i32, %arg1: memref<8x16384xf32, #tpu.memory_space<vmem>>, %arg2: memref<1x16384xf32, #tpu.memory_space<vmem>>, %arg3: memref<8x2xf32, #tpu.memory_space<vmem>>) attributes {dimension_semantics = [#tpu.dimension_semantics<parallel>], iteration_bounds = array<i64: 1>, scalar_prefetch = 0 : i64, scratch_operands = 0 : i64, tpu.core_type = #tpu.core_type<tc>, window_params = [{transform_indices = @transform_0, window_bounds = array<i64: 8, 16384>}, {pipeline_mode = #tpu.pipeline_mode<synchronous>, transform_indices = @transform_1, window_bounds = array<i64: 1, 16384>}, {transform_indices = @transform_2, window_bounds = array<i64: 8, 2>}]} {
    %c0 = arith.constant 0 : index
    %c0_0 = arith.constant 0 : index
    %0 = vector.load %arg1[%c0, %c0_0] : memref<8x16384xf32, #tpu.memory_space<vmem>>, vector<8x16384xf32>
    %c0_1 = arith.constant 0 : index
    %c0_2 = arith.constant 0 : index
    %1 = vector.load %arg2[%c0_1, %c0_2] : memref<1x16384xf32, #tpu.memory_space<vmem>>, vector<1x16384xf32>
    %2 = vector.broadcast %1 : vector<1x16384xf32> to vector<8x16384xf32>
    %3 = arith.mulf %0, %2 : vector<8x16384xf32>
    %cst = arith.constant dense<0.000000e+00> : vector<8xf32>
    %4 = vector.multi_reduction <add>, %3, %cst [1] : vector<8x16384xf32> to vector<8xf32>
    %5 = vector.shape_cast %4 : vector<8xf32> to vector<8x1xf32>
    %6 = tpu.iota {dimensions = array<i32: 1>} : vector<8x2xi32>
    %c0_i32 = arith.constant 0 : i32
    %7 = vector.broadcast %c0_i32 : i32 to vector<8x2xi32>
    %8 = arith.cmpi eq, %6, %7 : vector<8x2xi32>
    %cst_3 = arith.constant 1.000000e+00 : f32
    %cst_4 = arith.constant -1.000000e+00 : f32
    %9 = vector.broadcast %cst_3 : f32 to vector<8x2xf32>
    %10 = vector.broadcast %cst_4 : f32 to vector<8x2xf32>
    %11 = arith.select %8, %9, %10 : vector<8x2xi1>, vector<8x2xf32>
    %12 = vector.broadcast %5 : vector<8x1xf32> to vector<8x2xf32>
    %13 = arith.mulf %12, %11 : vector<8x2xf32>
    %cst_5 = arith.constant 0.000000e+00 : f32
    %14 = vector.broadcast %cst_5 : f32 to vector<8x2xf32>
    %15 = arith.subf %14, %13 : vector<8x2xf32>
    %16 = math.exp %15 : vector<8x2xf32>
    %cst_6 = arith.constant 1.000000e+00 : f32
    %17 = vector.broadcast %cst_6 : f32 to vector<8x2xf32>
    %18 = arith.addf %17, %16 : vector<8x2xf32>
    %cst_7 = arith.constant 1.000000e+00 : f32
    %19 = vector.broadcast %cst_7 : f32 to vector<8x2xf32>
    %20 = arith.divf %19, %18 : vector<8x2xf32>
    %c0_8 = arith.constant 0 : index
    %c0_9 = arith.constant 0 : index
    %21 = vector.load %arg3[%c0_8, %c0_9] : memref<8x2xf32, #tpu.memory_space<vmem>>, vector<8x2xf32>
    tpu.vector_store %arg3[%c0_8, %c0_9], %20 {strides = array<i32>} : memref<8x2xf32, #tpu.memory_space<vmem>>, vector<8x2xf32>,
    return
  }
  func.func @transform_0(%arg0: i32) -> (i32, i32) {
    %c0_i32 = arith.constant 0 : i32
    %c0_i32_0 = arith.constant 0 : i32
    return %arg0, %c0_i32 : i32, i32
  }
  func.func @transform_1(%arg0: i32) -> (i32, i32) {
    %c0_i32 = arith.constant 0 : i32
    %c0_i32_0 = arith.constant 0 : i32
    %c0_i32_1 = arith.constant 0 : i32
    return %c0_i32, %c0_i32_0 : i32, i32
  }
  func.func @transform_2(%arg0: i32) -> (i32, i32) {
    %c0_i32 = arith.constant 0 : i32
    %c0_i32_0 = arith.constant 0 : i32
    return %arg0, %c0_i32 : i32, i32
  }
}

</mosaic_0001>

<llo_original>
// kernel: tpu_custom_call.1
$region0: #{tpu_custom_call.1}
  #allocation0 [shape = 'u32[]', space=smem, size = 0x4, offset = 0x4, fixed_abs, tag = 'smem constant byte address 0x4 - core index']
  #allocation1 [shape = 'u32[144,128]{1,0:T(1,128)}', space=vmem, size = 0x12000, scoped, tag = 'internal scratch']
  %s0 = inlined_call_operand.hbm [shape: f32[8,16384], index: 0, kind: input, shape index: {}]
  %s1 = inlined_call_operand.hbm [shape: f32[1,16384], index: 1, kind: input, shape index: {}]
  %s2 = inlined_call_operand.vmem [shape: f32[8,2], index: 2, kind: output, shape index: {}]
  %s3 = sld [smem:[#allocation0]]
  $region26: #{tpu_custom_call.1} parent=0
    _
  %s5 = ssub.s32 1, %s3
  %s6 = scalar_select 0, %s5, %s3
  $region1: #{tpu_custom_call.1} parent=0
    #allocation2 [shape = 'u8[524288]{0}', space=vmem, size = 0x80000, scoped, tag = 'input window, operand 0, single buffered']
    #allocation3 [shape = 's32[1]{0}', space=sflag, size = 0x4, scoped, tag = 'scoped memory for tpu_custom_call.1']
    #allocation4 [shape = 'u8[65536]{0}', space=vmem, size = 0x10000, scoped, tag = 'input window, operand 1, single buffered']
    #allocation5 [shape = 's32[1]{0}', space=sflag, size = 0x4, scoped, tag = 'scoped memory for tpu_custom_call.1']
    %7 = vsyncpa [#allocation3], 0
    %8 = vsyncpa [#allocation5], 0
    // Predicated region
    $region2: #{tpu_custom_call.1} parent=1 // pred_check
      _
    $region3: #{tpu_custom_call.1} parent=1 // pred_check_branch
      %10 = sbr.rel (0) target = $region5
    $region4: #{tpu_custom_call.1} parent=1 // pred_region
      %s12 = ssub.s32 16384, 16384
      %13 = vsyncadd [#allocation3], %s12
      %s15 = sshll.u32 [#allocation2], 4
      %s16 = int_to_ptr.vmem [resolvable:$true] %s15
      %18 = dma.hbm_to_vmem [thread:$0]  %s0, 16384, %s16, [#allocation3]
    $region5: #{tpu_custom_call.1} parent=1 // pred_fallthru
      _
    // Predicated region
    $region6: #{tpu_custom_call.1} parent=1 // pred_check
      _
    $region7: #{tpu_custom_call.1} parent=1 // pred_check_branch
      %20 = sbr.rel (0) target = $region9
    $region8: #{tpu_custom_call.1} parent=1 // pred_region
      %s22 = ssub.s32 2048, 2048
      %23 = vsyncadd [#allocation5], %s22
      %s25 = sshll.u32 [#allocation4], 4
      %s26 = int_to_ptr.vmem [resolvable:$true] %s25
      %28 = dma.hbm_to_vmem [thread:$0]  %s1, 2048, %s26, [#allocation5]
    $region9: #{tpu_custom_call.1} parent=1 // pred_fallthru
      _
    // Predicated region
    $region10: #{tpu_custom_call.1} parent=1 // pred_check
      _
    $region11: #{tpu_custom_call.1} parent=1 // pred_check_branch
      %30 = sbr.rel (0) target = $region13
    $region12: #{tpu_custom_call.1} parent=1 // pred_region
      %31 = dma.done [#allocation3], 16384
    $region13: #{tpu_custom_call.1} parent=1 // pred_fallthru
      _
    // Predicated region
    $region14: #{tpu_custom_call.1} parent=1 // pred_check
      _
    $region15: #{tpu_custom_call.1} parent=1 // pred_check_branch
      %33 = sbr.rel (0) target = $region17
    $region16: #{tpu_custom_call.1} parent=1 // pred_region
      %34 = dma.done [#allocation5], 2048
    $region17: #{tpu_custom_call.1} parent=1 // pred_fallthru
      _
    %v35 = vld [vmem:[#allocation2] sm:$0xff]
    %v36 = vld [vmem:[#allocation2 + $0x8] sm:$0xff]
    %v37 = vld [vmem:[#allocation2 + $0x10] sm:$0xff]
    %v38 = vld [vmem:[#allocation2 + $0x18] sm:$0xff]
    %v39 = vld [vmem:[#allocation2 + $0x20] sm:$0xff]
    %v40 = vld [vmem:[#allocation2 + $0x28] sm:$0xff]
    %v41 = vld [vmem:[#allocation2 + $0x30] sm:$0xff]
    %v42 = vld [vmem:[#allocation2 + $0x38] sm:$0xff]
    %v43 = vld [vmem:[#allocation2 + $0x40] sm:$0xff]
    %v44 = vld [vmem:[#allocation2 + $0x48] sm:$0xff]
    %v45 = vld [vmem:[#allocation2 + $0x50] sm:$0xff]
    %v46 = vld [vmem:[#allocation2 + $0x58] sm:$0xff]
    %v47 = vld [vmem:[#allocation2 + $0x60] sm:$0xff]
    %v48 = vld [vmem:[#allocation2 + $0x68] sm:$0xff]
    %v49 = vld [vmem:[#allocation2 + $0x70] sm:$0xff]
    %v50 = vld [vmem:[#allocation2 + $0x78] sm:$0xff]
    %v51 = vld [vmem:[#allocation2 + $0x80] sm:$0xff]
    %v52 = vld [vmem:[#allocation2 + $0x88] sm:$0xff]
    %v53 = vld [vmem:[#allocation2 + $0x90] sm:$0xff]
    %v54 = vld [vmem:[#allocation2 + $0x98] sm:$0xff]
    %v55 = vld [vmem:[#allocation2 + $0xa0] sm:$0xff]
    %v56 = vld [vmem:[#allocation2 + $0xa8] sm:$0xff]
    %v57 = vld [vmem:[#allocation2 + $0xb0] sm:$0xff]
    %v58 = vld [vmem:[#allocation2 + $0xb8] sm:$0xff]
    %v59 = vld [vmem:[#allocation2 + $0xc0] sm:$0xff]
    %v60 = vld [vmem:[#allocation2 + $0xc8] sm:$0xff]
    %v61 = vld [vmem:[#allocation2 + $0xd0] sm:$0xff]
    %v62 = vld [vmem:[#allocation2 + $0xd8] sm:$0xff]
    %v63 = vld [vmem:[#allocation2 + $0xe0] sm:$0xff]
    %v64 = vld [vmem:[#allocation2 + $0xe8] sm:$0xff]
    %v65 = vld [vmem:[#allocation2 + $0xf0] sm:$0xff]
    %v66 = vld [vmem:[#allocation2 + $0xf8] sm:$0xff]
    %v67 = vld [vmem:[#allocation2 + $0x100] sm:$0xff]
    %v68 = vld [vmem:[#allocation2 + $0x108] sm:$0xff]
    %v69 = vld [vmem:[#allocation2 + $0x110] sm:$0xff]
    %v70 = vld [vmem:[#allocation2 + $0x118] sm:$0xff]
    %v71 = vld [vmem:[#allocation2 + $0x120] sm:$0xff]
    %v72 = vld [vmem:[#allocation2 + $0x128] sm:$0xff]
    %v73 = vld [vmem:[#allocation2 + $0x130] sm:$0xff]
    %v74 = vld [vmem:[#allocation2 + $0x138] sm:$0xff]
    %v75 = vld [vmem:[#allocation2 + $0x140] sm:$0xff]
    %v76 = vld [vmem:[#allocation2 + $0x148] sm:$0xff]
    %v77 = vld [vmem:[#allocation2 + $0x150] sm:$0xff]
    %v78 = vld [vmem:[#allocation2 + $0x158] sm:$0xff]
    %v79 = vld [vmem:[#allocation2 + $0x160] sm:$0xff]
    %v80 = vld [vmem:[#allocation2 + $0x168] sm:$0xff]
    %v81 = vld [vmem:[#allocation2 + $0x170] sm:$0xff]
    %v82 = vld [vmem:[#allocation2 + $0x178] sm:$0xff]
    %v83 = vld [vmem:[#allocation2 + $0x180] sm:$0xff]
    %v84 = vld [vmem:[#allocation2 + $0x188] sm:$0xff]
    %v85 = vld [vmem:[#allocation2 + $0x190] sm:$0xff]
    %v86 = vld [vmem:[#allocation2 + $0x198] sm:$0xff]
    %v87 = vld [vmem:[#allocation2 + $0x1a0] sm:$0xff]
    %v88 = vld [vmem:[#allocation2 + $0x1a8] sm:$0xff]
    %v89 = vld [vmem:[#allocation2 + $0x1b0] sm:$0xff]
    %v90 = vld [vmem:[#allocation2 + $0x1b8] sm:$0xff]
    %v91 = vld [vmem:[#allocation2 + $0x1c0] sm:$0xff]
    %v92 = vld [vmem:[#allocation2 + $0x1c8] sm:$0xff]
    %v93 = vld [vmem:[#allocation2 + $0x1d0] sm:$0xff]
    %v94 = vld [vmem:[#allocation2 + $0x1d8] sm:$0xff]
    %v95 = vld [vmem:[#allocation2 + $0x1e0] sm:$0xff]
    %v96 = vld [vmem:[#allocation2 + $0x1e8] sm:$0xff]
    %v97 = vld [vmem:[#allocation2 + $0x1f0] sm:$0xff]
    %v98 = vld [vmem:[#allocation2 + $0x1f8] sm:$0xff]
    %v99 = vld [vmem:[#allocation2 + $0x200] sm:$0xff]
    %v100 = vld [vmem:[#allocation2 + $0x208] sm:$0xff]
    %v101 = vld [vmem:[#allocation2 + $0x210] sm:$0xff]
    %v102 = vld [vmem:[#allocation2 + $0x218] sm:$0xff]
    %v103 = vld [vmem:[#allocation2 + $0x220] sm:$0xff]
    %v104 = vld [vmem:[#allocation2 + $0x228] sm:$0xff]
    %v105 = vld [vmem:[#allocation2 + $0x230] sm:$0xff]
    %v106 = vld [vmem:[#allocation2 + $0x238] sm:$0xff]
    %v107 = vld [vmem:[#allocation2 + $0x240] sm:$0xff]
    %v108 = vld [vmem:[#allocation2 + $0x248] sm:$0xff]
    %v109 = vld [vmem:[#allocation2 + $0x250] sm:$0xff]
    %v110 = vld [vmem:[#allocation2 + $0x258] sm:$0xff]
    %v111 = vld [vmem:[#allocation2 + $0x260] sm:$0xff]
    %v112 = vld [vmem:[#allocation2 + $0x268] sm:$0xff]
    %v113 = vld [vmem:[#allocation2 + $0x270] sm:$0xff]
    %v114 = vld [vmem:[#allocation2 + $0x278] sm:$0xff]
    %v115 = vld [vmem:[#allocation2 + $0x280] sm:$0xff]
    %v116 = vld [vmem:[#allocation2 + $0x288] sm:$0xff]
    %v117 = vld [vmem:[#allocation2 + $0x290] sm:$0xff]
    %v118 = vld [vmem:[#allocation2 + $0x298] sm:$0xff]
    %v119 = vld [vmem:[#allocation2 + $0x2a0] sm:$0xff]
    %v120 = vld [vmem:[#allocation2 + $0x2a8] sm:$0xff]
    %v121 = vld [vmem:[#allocation2 + $0x2b0] sm:$0xff]
    %v122 = vld [vmem:[#allocation2 + $0x2b8] sm:$0xff]
    %v123 = vld [vmem:[#allocation2 + $0x2c0] sm:$0xff]
    %v124 = vld [vmem:[#allocation2 + $0x2c8] sm:$0xff]
    %v125 = vld [vmem:[#allocation2 + $0x2d0] sm:$0xff]
    %v126 = vld [vmem:[#allocation2 + $0x2d8] sm:$0xff]
    %v127 = vld [vmem:[#allocation2 + $0x2e0] sm:$0xff]
    %v128 = vld [vmem:[#allocation2 + $0x2e8] sm:$0xff]
    %v129 = vld [vmem:[#allocation2 + $0x2f0] sm:$0xff]
    %v130 = vld [vmem:[#allocation2 + $0x2f8] sm:$0xff]
    %v131 = vld [vmem:[#allocation2 + $0x300] sm:$0xff]
    %v132 = vld [vmem:[#allocation2 + $0x308] sm:$0xff]
    %v133 = vld [vmem:[#allocation2 + $0x310] sm:$0xff]
    %v134 = vld [vmem:[#allocation2 + $0x318] sm:$0xff]
    %v135 = vld [vmem:[#allocation2 + $0x320] sm:$0xff]
    %v136 = vld [vmem:[#allocation2 + $0x328] sm:$0xff]
    %v137 = vld [vmem:[#allocation2 + $0x330] sm:$0xff]
    %v138 = vld [vmem:[#allocation2 + $0x338] sm:$0xff]
    %v139 = vld [vmem:[#allocation2 + $0x340] sm:$0xff]
    %v140 = vld [vmem:[#allocation2 + $0x348] sm:$0xff]
    %v141 = vld [vmem:[#allocation2 + $0x350] sm:$0xff]
    %v142 = vld [vmem:[#allocation2 + $0x358] sm:$0xff]
    %v143 = vld [vmem:[#allocation2 + $0x360] sm:$0xff]
    %v144 = vld [vmem:[#allocation2 + $0x368] sm:$0xff]
    %v145 = vld [vmem:[#allocation2 + $0x370] sm:$0xff]
    %v146 = vld [vmem:[#allocation2 + $0x378] sm:$0xff]
    %v147 = vld [vmem:[#allocation2 + $0x380] sm:$0xff]
    %v148 = vld [vmem:[#allocation2 + $0x388] sm:$0xff]
    %v149 = vld [vmem:[#allocation2 + $0x390] sm:$0xff]
    %v150 = vld [vmem:[#allocation2 + $0x398] sm:$0xff]
    %v151 = vld [vmem:[#allocation2 + $0x3a0] sm:$0xff]
    %v152 = vld [vmem:[#allocation2 + $0x3a8] sm:$0xff]
    %v153 = vld [vmem:[#allocation2 + $0x3b0] sm:$0xff]
    %v154 = vld [vmem:[#allocation2 + $0x3b8] sm:$0xff]
    %v155 = vld [vmem:[#allocation2 + $0x3c0] sm:$0xff]
    %v156 = vld [vmem:[#allocation2 + $0x3c8] sm:$0xff]
    %v157 = vld [vmem:[#allocation2 + $0x3d0] sm:$0xff]
    %v158 = vld [vmem:[#allocation2 + $0x3d8] sm:$0xff]
    %v159 = vld [vmem:[#allocation2 + $0x3e0] sm:$0xff]
    %v160 = vld [vmem:[#allocation2 + $0x3e8] sm:$0xff]
    %v161 = vld [vmem:[#allocation2 + $0x3f0] sm:$0xff]
    %v162 = vld [vmem:[#allocation2 + $0x3f8] sm:$0xff]
    %v163 = vld [vmem:[#allocation4] sm:$0xff]
    %v164 = vld [vmem:[#allocation4 + $0x8] sm:$0xff]
    %v165 = vld [vmem:[#allocation4 + $0x10] sm:$0xff]
    %v166 = vld [vmem:[#allocation4 + $0x18] sm:$0xff]
    %v167 = vld [vmem:[#allocation4 + $0x20] sm:$0xff]
    %v168 = vld [vmem:[#allocation4 + $0x28] sm:$0xff]
    %v169 = vld [vmem:[#allocation4 + $0x30] sm:$0xff]
    %v170 = vld [vmem:[#allocation4 + $0x38] sm:$0xff]
    %v171 = vld [vmem:[#allocation4 + $0x40] sm:$0xff]
    %v172 = vld [vmem:[#allocation4 + $0x48] sm:$0xff]
    %v173 = vld [vmem:[#allocation4 + $0x50] sm:$0xff]
    %v174 = vld [vmem:[#allocation4 + $0x58] sm:$0xff]
    %v175 = vld [vmem:[#allocation4 + $0x60] sm:$0xff]
    %v176 = vld [vmem:[#allocation4 + $0x68] sm:$0xff]
    %v177 = vld [vmem:[#allocation4 + $0x70] sm:$0xff]
    %v178 = vld [vmem:[#allocation4 + $0x78] sm:$0xff]
    %v195 = vlaneseq
    %v196 = vshrl.u32 %v195, 7
    %v197 = vsub.s32 0, %v196
    %v198 = vrot.slane %v163, %v197
    %v199 = vlaneseq
    %v200 = vshrl.u32 %v199, 7
    %v201 = vsub.s32 1, %v200
    %v202 = vrot.slane %v163, %v201
    %v203 = vlaneseq
    %v204 = vshrl.u32 %v203, 7
    %v205 = vsub.s32 2, %v204
    %v206 = vrot.slane %v163, %v205
    %v207 = vlaneseq
    %v208 = vshrl.u32 %v207, 7
    %v209 = vsub.s32 3, %v208
    %v210 = vrot.slane %v163, %v209
    %v211 = vlaneseq
    %v212 = vshrl.u32 %v211, 7
    %v213 = vsub.s32 4, %v212
    %v214 = vrot.slane %v163, %v213
    %v215 = vlaneseq
    %v216 = vshrl.u32 %v215, 7
    %v217 = vsub.s32 5, %v216
    %v218 = vrot.slane %v163, %v217
    %v219 = vlaneseq
    %v220 = vshrl.u32 %v219, 7
    %v221 = vsub.s32 6, %v220
    %v222 = vrot.slane %v163, %v221
    %v223 = vlaneseq
    %v224 = vshrl.u32 %v223, 7
    %v225 = vsub.s32 7, %v224
    %v226 = vrot.slane %v163, %v225
    %v227 = vlaneseq
    %v228 = vshrl.u32 %v227, 7
    %v229 = vsub.s32 0, %v228
    %v230 = vrot.slane %v164, %v229
    %v231 = vlaneseq
    %v232 = vshrl.u32 %v231, 7
    %v233 = vsub.s32 1, %v232
    %v234 = vrot.slane %v164, %v233
    %v235 = vlaneseq
    %v236 = vshrl.u32 %v235, 7
    %v237 = vsub.s32 2, %v236
    %v238 = vrot.slane %v164, %v237
    %v239 = vlaneseq
    %v240 = vshrl.u32 %v239, 7
    %v241 = vsub.s32 3, %v240
    %v242 = vrot.slane %v164, %v241
    %v243 = vlaneseq
    %v244 = vshrl.u32 %v243, 7
    %v245 = vsub.s32 4, %v244
    %v246 = vrot.slane %v164, %v245
    %v247 = vlaneseq
    %v248 = vshrl.u32 %v247, 7
    %v249 = vsub.s32 5, %v248
    %v250 = vrot.slane %v164, %v249
    %v251 = vlaneseq
    %v252 = vshrl.u32 %v251, 7
    %v253 = vsub.s32 6, %v252
    %v254 = vrot.slane %v164, %v253
    %v255 = vlaneseq
    %v256 = vshrl.u32 %v255, 7
    %v257 = vsub.s32 7, %v256
    %v258 = vrot.slane %v164, %v257
    %v259 = vlaneseq
    %v260 = vshrl.u32 %v259, 7
    %v261 = vsub.s32 0, %v260
    %v262 = vrot.slane %v165, %v261
    %v263 = vlaneseq
    %v264 = vshrl.u32 %v263, 7
    %v265 = vsub.s32 1, %v264
    %v266 = vrot.slane %v165, %v265
    %v267 = vlaneseq
    %v268 = vshrl.u32 %v267, 7
    %v269 = vsub.s32 2, %v268
    %v270 = vrot.slane %v165, %v269
    %v271 = vlaneseq
    %v272 = vshrl.u32 %v271, 7
    %v273 = vsub.s32 3, %v272
    %v274 = vrot.slane %v165, %v273
    %v275 = vlaneseq
    %v276 = vshrl.u32 %v275, 7
    %v277 = vsub.s32 4, %v276
    %v278 = vrot.slane %v165, %v277
    %v279 = vlaneseq
    %v280 = vshrl.u32 %v279, 7
    %v281 = vsub.s32 5, %v280
    %v282 = vrot.slane %v165, %v281
    %v283 = vlaneseq
    %v284 = vshrl.u32 %v283, 7
    %v285 = vsub.s32 6, %v284
    %v286 = vrot.slane %v165, %v285
    %v287 = vlaneseq
    %v288 = vshrl.u32 %v287, 7
    %v289 = vsub.s32 7, %v288
    %v290 = vrot.slane %v165, %v289
    %v291 = vlaneseq
    %v292 = vshrl.u32 %v291, 7
    %v293 = vsub.s32 0, %v292
    %v294 = vrot.slane %v166, %v293
    %v295 = vlaneseq
    %v296 = vshrl.u32 %v295, 7
    %v297 = vsub.s32 1, %v296
    %v298 = vrot.slane %v166, %v297
    %v299 = vlaneseq
    %v300 = vshrl.u32 %v299, 7
    %v301 = vsub.s32 2, %v300
    %v302 = vrot.slane %v166, %v301
    %v303 = vlaneseq
    %v304 = vshrl.u32 %v303, 7
    %v305 = vsub.s32 3, %v304
    %v306 = vrot.slane %v166, %v305
    %v307 = vlaneseq
    %v308 = vshrl.u32 %v307, 7
    %v309 = vsub.s32 4, %v308
    %v310 = vrot.slane %v166, %v309
    %v311 = vlaneseq
    %v312 = vshrl.u32 %v311, 7
    %v313 = vsub.s32 5, %v312
    %v314 = vrot.slane %v166, %v313
    %v315 = vlaneseq
    %v316 = vshrl.u32 %v315, 7
    %v317 = vsub.s32 6, %v316
    %v318 = vrot.slane %v166, %v317
    %v319 = vlaneseq
    %v320 = vshrl.u32 %v319, 7
    %v321 = vsub.s32 7, %v320
    %v322 = vrot.slane %v166, %v321
    %v323 = vlaneseq
    %v324 = vshrl.u32 %v323, 7
    %v325 = vsub.s32 0, %v324
    %v326 = vrot.slane %v167, %v325
    %v327 = vlaneseq
    %v328 = vshrl.u32 %v327, 7
    %v329 = vsub.s32 1, %v328
    %v330 = vrot.slane %v167, %v329
    %v331 = vlaneseq
    %v332 = vshrl.u32 %v331, 7
    %v333 = vsub.s32 2, %v332
    %v334 = vrot.slane %v167, %v333
    %v335 = vlaneseq
    %v336 = vshrl.u32 %v335, 7
    %v337 = vsub.s32 3, %v336
    %v338 = vrot.slane %v167, %v337
    %v339 = vlaneseq
    %v340 = vshrl.u32 %v339, 7
    %v341 = vsub.s32 4, %v340
    %v342 = vrot.slane %v167, %v341
    %v343 = vlaneseq
    %v344 = vshrl.u32 %v343, 7
    %v345 = vsub.s32 5, %v344
    %v346 = vrot.slane %v167, %v345
    %v347 = vlaneseq
    %v348 = vshrl.u32 %v347, 7
    %v349 = vsub.s32 6, %v348
    %v350 = vrot.slane %v167, %v349
    %v351 = vlaneseq
    %v352 = vshrl.u32 %v351, 7
    %v353 = vsub.s32 7, %v352
    %v354 = vrot.slane %v167, %v353
    %v355 = vlaneseq
    %v356 = vshrl.u32 %v355, 7
    %v357 = vsub.s32 0, %v356
    %v358 = vrot.slane %v168, %v357
    %v359 = vlaneseq
    %v360 = vshrl.u32 %v359, 7
    %v361 = vsub.s32 1, %v360
    %v362 = vrot.slane %v168, %v361
    %v363 = vlaneseq
    %v364 = vshrl.u32 %v363, 7
    %v365 = vsub.s32 2, %v364
    %v366 = vrot.slane %v168, %v365
    %v367 = vlaneseq
    %v368 = vshrl.u32 %v367, 7
    %v369 = vsub.s32 3, %v368
    %v370 = vrot.slane %v168, %v369
    %v371 = vlaneseq
    %v372 = vshrl.u32 %v371, 7
    %v373 = vsub.s32 4, %v372
    %v374 = vrot.slane %v168, %v373
    %v375 = vlaneseq
    %v376 = vshrl.u32 %v375, 7
    %v377 = vsub.s32 5, %v376
    %v378 = vrot.slane %v168, %v377
    %v379 = vlaneseq
    %v380 = vshrl.u32 %v379, 7
    %v381 = vsub.s32 6, %v380
    %v382 = vrot.slane %v168, %v381
    %v383 = vlaneseq
    %v384 = vshrl.u32 %v383, 7
    %v385 = vsub.s32 7, %v384
    %v386 = vrot.slane %v168, %v385
    %v387 = vlaneseq
    %v388 = vshrl.u32 %v387, 7
    %v389 = vsub.s32 0, %v388
    %v390 = vrot.slane %v169, %v389
    %v391 = vlaneseq
    %v392 = vshrl.u32 %v391, 7
    %v393 = vsub.s32 1, %v392
    %v394 = vrot.slane %v169, %v393
    %v395 = vlaneseq
    %v396 = vshrl.u32 %v395, 7
    %v397 = vsub.s32 2, %v396
    %v398 = vrot.slane %v169, %v397
    %v399 = vlaneseq
    %v400 = vshrl.u32 %v399, 7
    %v401 = vsub.s32 3, %v400
    %v402 = vrot.slane %v169, %v401
    %v403 = vlaneseq
    %v404 = vshrl.u32 %v403, 7
    %v405 = vsub.s32 4, %v404
    %v406 = vrot.slane %v169, %v405
    %v407 = vlaneseq
    %v408 = vshrl.u32 %v407, 7
    %v409 = vsub.s32 5, %v408
    %v410 = vrot.slane %v169, %v409
    %v411 = vlaneseq
    %v412 = vshrl.u32 %v411, 7
    %v413 = vsub.s32 6, %v412
    %v414 = vrot.slane %v169, %v413
    %v415 = vlaneseq
    %v416 = vshrl.u32 %v415, 7
    %v417 = vsub.s32 7, %v416
    %v418 = vrot.slane %v169, %v417
    %v419 = vlaneseq
    %v420 = vshrl.u32 %v419, 7
    %v421 = vsub.s32 0, %v420
    %v422 = vrot.slane %v170, %v421
    %v423 = vlaneseq
    %v424 = vshrl.u32 %v423, 7
    %v425 = vsub.s32 1, %v424
    %v426 = vrot.slane %v170, %v425
    %v427 = vlaneseq
    %v428 = vshrl.u32 %v427, 7
    %v429 = vsub.s32 2, %v428
    %v430 = vrot.slane %v170, %v429
    %v431 = vlaneseq
    %v432 = vshrl.u32 %v431, 7
    %v433 = vsub.s32 3, %v432
    %v434 = vrot.slane %v170, %v433
    %v435 = vlaneseq
    %v436 = vshrl.u32 %v435, 7
    %v437 = vsub.s32 4, %v436
    %v438 = vrot.slane %v170, %v437
    %v439 = vlaneseq
    %v440 = vshrl.u32 %v439, 7
    %v441 = vsub.s32 5, %v440
    %v442 = vrot.slane %v170, %v441
    %v443 = vlaneseq
    %v444 = vshrl.u32 %v443, 7
    %v445 = vsub.s32 6, %v444
    %v446 = vrot.slane %v170, %v445
    %v447 = vlaneseq
    %v448 = vshrl.u32 %v447, 7
    %v449 = vsub.s32 7, %v448
    %v450 = vrot.slane %v170, %v449
    %v451 = vlaneseq
    %v452 = vshrl.u32 %v451, 7
    %v453 = vsub.s32 0, %v452
    %v454 = vrot.slane %v171, %v453
    %v455 = vlaneseq
    %v456 = vshrl.u32 %v455, 7
    %v457 = vsub.s32 1, %v456
    %v458 = vrot.slane %v171, %v457
    %v459 = vlaneseq
    %v460 = vshrl.u32 %v459, 7
    %v461 = vsub.s32 2, %v460
    %v462 = vrot.slane %v171, %v461
    %v463 = vlaneseq
    %v464 = vshrl.u32 %v463, 7
    %v465 = vsub.s32 3, %v464
    %v466 = vrot.slane %v171, %v465
    %v467 = vlaneseq
    %v468 = vshrl.u32 %v467, 7
    %v469 = vsub.s32 4, %v468
    %v470 = vrot.slane %v171, %v469
    %v471 = vlaneseq
    %v472 = vshrl.u32 %v471, 7
    %v473 = vsub.s32 5, %v472
    %v474 = vrot.slane %v171, %v473
    %v475 = vlaneseq
    %v476 = vshrl.u32 %v475, 7
    %v477 = vsub.s32 6, %v476
    %v478 = vrot.slane %v171, %v477
    %v479 = vlaneseq
    %v480 = vshrl.u32 %v479, 7
    %v481 = vsub.s32 7, %v480
    %v482 = vrot.slane %v171, %v481
    %v483 = vlaneseq
    %v484 = vshrl.u32 %v483, 7
    %v485 = vsub.s32 0, %v484
    %v486 = vrot.slane %v172, %v485
    %v487 = vlaneseq
    %v488 = vshrl.u32 %v487, 7
    %v489 = vsub.s32 1, %v488
    %v490 = vrot.slane %v172, %v489
    %v491 = vlaneseq
    %v492 = vshrl.u32 %v491, 7
    %v493 = vsub.s32 2, %v492
    %v494 = vrot.slane %v172, %v493
    %v495 = vlaneseq
    %v496 = vshrl.u32 %v495, 7
    %v497 = vsub.s32 3, %v496
    %v498 = vrot.slane %v172, %v497
    %v499 = vlaneseq
    %v500 = vshrl.u32 %v499, 7
    %v501 = vsub.s32 4, %v500
    %v502 = vrot.slane %v172, %v501
    %v503 = vlaneseq
    %v504 = vshrl.u32 %v503, 7
    %v505 = vsub.s32 5, %v504
    %v506 = vrot.slane %v172, %v505
    %v507 = vlaneseq
    %v508 = vshrl.u32 %v507, 7
    %v509 = vsub.s32 6, %v508
    %v510 = vrot.slane %v172, %v509
    %v511 = vlaneseq
    %v512 = vshrl.u32 %v511, 7
    %v513 = vsub.s32 7, %v512
    %v514 = vrot.slane %v172, %v513
    %v515 = vlaneseq
    %v516 = vshrl.u32 %v515, 7
    %v517 = vsub.s32 0, %v516
    %v518 = vrot.slane %v173, %v517
    %v519 = vlaneseq
    %v520 = vshrl.u32 %v519, 7
    %v521 = vsub.s32 1, %v520
    %v522 = vrot.slane %v173, %v521
    %v523 = vlaneseq
    %v524 = vshrl.u32 %v523, 7
    %v525 = vsub.s32 2, %v524
    %v526 = vrot.slane %v173, %v525
    %v527 = vlaneseq
    %v528 = vshrl.u32 %v527, 7
    %v529 = vsub.s32 3, %v528
    %v530 = vrot.slane %v173, %v529
    %v531 = vlaneseq
    %v532 = vshrl.u32 %v531, 7
    %v533 = vsub.s32 4, %v532
    %v534 = vrot.slane %v173, %v533
    %v535 = vlaneseq
    %v536 = vshrl.u32 %v535, 7
    %v537 = vsub.s32 5, %v536
    %v538 = vrot.slane %v173, %v537
    %v539 = vlaneseq
    %v540 = vshrl.u32 %v539, 7
    %v541 = vsub.s32 6, %v540
    %v542 = vrot.slane %v173, %v541
    %v543 = vlaneseq
    %v544 = vshrl.u32 %v543, 7
    %v545 = vsub.s32 7, %v544
    %v546 = vrot.slane %v173, %v545
    %v547 = vlaneseq
    %v548 = vshrl.u32 %v547, 7
    %v549 = vsub.s32 0, %v548
    %v550 = vrot.slane %v174, %v549
    %v551 = vlaneseq
    %v552 = vshrl.u32 %v551, 7
    %v553 = vsub.s32 1, %v552
    %v554 = vrot.slane %v174, %v553
    %v555 = vlaneseq
    %v556 = vshrl.u32 %v555, 7
    %v557 = vsub.s32 2, %v556
    %v558 = vrot.slane %v174, %v557
    %v559 = vlaneseq
    %v560 = vshrl.u32 %v559, 7
    %v561 = vsub.s32 3, %v560
    %v562 = vrot.slane %v174, %v561
    %v563 = vlaneseq
    %v564 = vshrl.u32 %v563, 7
    %v565 = vsub.s32 4, %v564
    %v566 = vrot.slane %v174, %v565
    %v567 = vlaneseq
    %v568 = vshrl.u32 %v567, 7
    %v569 = vsub.s32 5, %v568
    %v570 = vrot.slane %v174, %v569
    %v571 = vlaneseq
    %v572 = vshrl.u32 %v571, 7
    %v573 = vsub.s32 6, %v572
    %v574 = vrot.slane %v174, %v573
    %v575 = vlaneseq
    %v576 = vshrl.u32 %v575, 7
    %v577 = vsub.s32 7, %v576
    %v578 = vrot.slane %v174, %v577
    %v579 = vlaneseq
    %v580 = vshrl.u32 %v579, 7
    %v581 = vsub.s32 0, %v580
    %v582 = vrot.slane %v175, %v581
    %v583 = vlaneseq
    %v584 = vshrl.u32 %v583, 7
    %v585 = vsub.s32 1, %v584
    %v586 = vrot.slane %v175, %v585
    %v587 = vlaneseq
    %v588 = vshrl.u32 %v587, 7
    %v589 = vsub.s32 2, %v588
    %v590 = vrot.slane %v175, %v589
    %v591 = vlaneseq
    %v592 = vshrl.u32 %v591, 7
    %v593 = vsub.s32 3, %v592
    %v594 = vrot.slane %v175, %v593
    %v595 = vlaneseq
    %v596 = vshrl.u32 %v595, 7
    %v597 = vsub.s32 4, %v596
    %v598 = vrot.slane %v175, %v597
    %v599 = vlaneseq
    %v600 = vshrl.u32 %v599, 7
    %v601 = vsub.s32 5, %v600
    %v602 = vrot.slane %v175, %v601
    %v603 = vlaneseq
    %v604 = vshrl.u32 %v603, 7
    %v605 = vsub.s32 6, %v604
    %v606 = vrot.slane %v175, %v605
    %v607 = vlaneseq
    %v608 = vshrl.u32 %v607, 7
    %v609 = vsub.s32 7, %v608
    %v610 = vrot.slane %v175, %v609
    %v611 = vlaneseq
    %v612 = vshrl.u32 %v611, 7
    %v613 = vsub.s32 0, %v612
    %v614 = vrot.slane %v176, %v613
    %v615 = vlaneseq
    %v616 = vshrl.u32 %v615, 7
    %v617 = vsub.s32 1, %v616
    %v618 = vrot.slane %v176, %v617
    %v619 = vlaneseq
    %v620 = vshrl.u32 %v619, 7
    %v621 = vsub.s32 2, %v620
    %v622 = vrot.slane %v176, %v621
    %v623 = vlaneseq
    %v624 = vshrl.u32 %v623, 7
    %v625 = vsub.s32 3, %v624
    %v626 = vrot.slane %v176, %v625
    %v627 = vlaneseq
    %v628 = vshrl.u32 %v627, 7
    %v629 = vsub.s32 4, %v628
    %v630 = vrot.slane %v176, %v629
    %v631 = vlaneseq
    %v632 = vshrl.u32 %v631, 7
    %v633 = vsub.s32 5, %v632
    %v634 = vrot.slane %v176, %v633
    %v635 = vlaneseq
    %v636 = vshrl.u32 %v635, 7
    %v637 = vsub.s32 6, %v636
    %v638 = vrot.slane %v176, %v637
    %v639 = vlaneseq
    %v640 = vshrl.u32 %v639, 7
    %v641 = vsub.s32 7, %v640
    %v642 = vrot.slane %v176, %v641
    %v643 = vlaneseq
    %v644 = vshrl.u32 %v643, 7
    %v645 = vsub.s32 0, %v644
    %v646 = vrot.slane %v177, %v645
    %v647 = vlaneseq
    %v648 = vshrl.u32 %v647, 7
    %v649 = vsub.s32 1, %v648
    %v650 = vrot.slane %v177, %v649
    %v651 = vlaneseq
    %v652 = vshrl.u32 %v651, 7
    %v653 = vsub.s32 2, %v652
    %v654 = vrot.slane %v177, %v653
    %v655 = vlaneseq
    %v656 = vshrl.u32 %v655, 7
    %v657 = vsub.s32 3, %v656
    %v658 = vrot.slane %v177, %v657
    %v659 = vlaneseq
    %v660 = vshrl.u32 %v659, 7
    %v661 = vsub.s32 4, %v660
    %v662 = vrot.slane %v177, %v661
    %v663 = vlaneseq
    %v664 = vshrl.u32 %v663, 7
    %v665 = vsub.s32 5, %v664
    %v666 = vrot.slane %v177, %v665
    %v667 = vlaneseq
    %v668 = vshrl.u32 %v667, 7
    %v669 = vsub.s32 6, %v668
    %v670 = vrot.slane %v177, %v669
    %v671 = vlaneseq
    %v672 = vshrl.u32 %v671, 7
    %v673 = vsub.s32 7, %v672
    %v674 = vrot.slane %v177, %v673
    %v675 = vlaneseq
    %v676 = vshrl.u32 %v675, 7
    %v677 = vsub.s32 0, %v676
    %v678 = vrot.slane %v178, %v677
    %v679 = vlaneseq
    %v680 = vshrl.u32 %v679, 7
    %v681 = vsub.s32 1, %v680
    %v682 = vrot.slane %v178, %v681
    %v683 = vlaneseq
    %v684 = vshrl.u32 %v683, 7
    %v685 = vsub.s32 2, %v684
    %v686 = vrot.slane %v178, %v685
    %v687 = vlaneseq
    %v688 = vshrl.u32 %v687, 7
    %v689 = vsub.s32 3, %v688
    %v690 = vrot.slane %v178, %v689
    %v691 = vlaneseq
    %v692 = vshrl.u32 %v691, 7
    %v693 = vsub.s32 4, %v692
    %v694 = vrot.slane %v178, %v693
    %v695 = vlaneseq
    %v696 = vshrl.u32 %v695, 7
    %v697 = vsub.s32 5, %v696
    %v698 = vrot.slane %v178, %v697
    %v699 = vlaneseq
    %v700 = vshrl.u32 %v699, 7
    %v701 = vsub.s32 6, %v700
    %v702 = vrot.slane %v178, %v701
    %v703 = vlaneseq
    %v704 = vshrl.u32 %v703, 7
    %v705 = vsub.s32 7, %v704
    %v706 = vrot.slane %v178, %v705
    %v835 = vmul.f32 %v35, %v198
    %v836 = vmul.f32 %v36, %v202
    %v837 = vmul.f32 %v37, %v206
    %v838 = vmul.f32 %v38, %v210
    %v839 = vmul.f32 %v39, %v214
    %v840 = vmul.f32 %v40, %v218
    %v841 = vmul.f32 %v41, %v222
    %v842 = vmul.f32 %v42, %v226
    %v843 = vmul.f32 %v43, %v230
    %v844 = vmul.f32 %v44, %v234
    %v845 = vmul.f32 %v45, %v238
    %v846 = vmul.f32 %v46, %v242
    %v847 = vmul.f32 %v47, %v246
    %v848 = vmul.f32 %v48, %v250
    %v849 = vmul.f32 %v49, %v254
    %v850 = vmul.f32 %v50, %v258
    %v851 = vmul.f32 %v51, %v262
    %v852 = vmul.f32 %v52, %v266
    %v853 = vmul.f32 %v53, %v270
    %v854 = vmul.f32 %v54, %v274
    %v855 = vmul.f32 %v55, %v278
    %v856 = vmul.f32 %v56, %v282
    %v857 = vmul.f32 %v57, %v286
    %v858 = vmul.f32 %v58, %v290
    %v859 = vmul.f32 %v59, %v294
    %v860 = vmul.f32 %v60, %v298
    %v861 = vmul.f32 %v61, %v302
    %v862 = vmul.f32 %v62, %v306
    %v863 = vmul.f32 %v63, %v310
    %v864 = vmul.f32 %v64, %v314
    %v865 = vmul.f32 %v65, %v318
    %v866 = vmul.f32 %v66, %v322
    %v867 = vmul.f32 %v67, %v326
    %v868 = vmul.f32 %v68, %v330
    %v869 = vmul.f32 %v69, %v334
    %v870 = vmul.f32 %v70, %v338
    %v871 = vmul.f32 %v71, %v342
    %v872 = vmul.f32 %v72, %v346
    %v873 = vmul.f32 %v73, %v350
    %v874 = vmul.f32 %v74, %v354
    %v875 = vmul.f32 %v75, %v358
    %v876 = vmul.f32 %v76, %v362
    %v877 = vmul.f32 %v77, %v366
    %v878 = vmul.f32 %v78, %v370
    %v879 = vmul.f32 %v79, %v374
    %v880 = vmul.f32 %v80, %v378
    %v881 = vmul.f32 %v81, %v382
    %v882 = vmul.f32 %v82, %v386
    %v883 = vmul.f32 %v83, %v390
    %v884 = vmul.f32 %v84, %v394
    %v885 = vmul.f32 %v85, %v398
    %v886 = vmul.f32 %v86, %v402
    %v887 = vmul.f32 %v87, %v406
    %v888 = vmul.f32 %v88, %v410
    %v889 = vmul.f32 %v89, %v414
    %v890 = vmul.f32 %v90, %v418
    %v891 = vmul.f32 %v91, %v422
    %v892 = vmul.f32 %v92, %v426
    %v893 = vmul.f32 %v93, %v430
    %v894 = vmul.f32 %v94, %v434
    %v895 = vmul.f32 %v95, %v438
    %v896 = vmul.f32 %v96, %v442
    %v897 = vmul.f32 %v97, %v446
    %v898 = vmul.f32 %v98, %v450
    %v899 = vmul.f32 %v99, %v454
    %v900 = vmul.f32 %v100, %v458
    %v901 = vmul.f32 %v101, %v462
    %v902 = vmul.f32 %v102, %v466
    %v903 = vmul.f32 %v103, %v470
    %v904 = vmul.f32 %v104, %v474
    %v905 = vmul.f32 %v105, %v478
    %v906 = vmul.f32 %v106, %v482
    %v907 = vmul.f32 %v107, %v486
    %v908 = vmul.f32 %v108, %v490
    %v909 = vmul.f32 %v109, %v494
    %v910 = vmul.f32 %v110, %v498
    %v911 = vmul.f32 %v111, %v502
    %v912 = vmul.f32 %v112, %v506
    %v913 = vmul.f32 %v113, %v510
    %v914 = vmul.f32 %v114, %v514
    %v915 = vmul.f32 %v115, %v518
    %v916 = vmul.f32 %v116, %v522
    %v917 = vmul.f32 %v117, %v526
    %v918 = vmul.f32 %v118, %v530
    %v919 = vmul.f32 %v119, %v534
    %v920 = vmul.f32 %v120, %v538
    %v921 = vmul.f32 %v121, %v542
    %v922 = vmul.f32 %v122, %v546
    %v923 = vmul.f32 %v123, %v550
    %v924 = vmul.f32 %v124, %v554
    %v925 = vmul.f32 %v125, %v558
    %v926 = vmul.f32 %v126, %v562
    %v927 = vmul.f32 %v127, %v566
    %v928 = vmul.f32 %v128, %v570
    %v929 = vmul.f32 %v129, %v574
    %v930 = vmul.f32 %v130, %v578
    %v931 = vmul.f32 %v131, %v582
    %v932 = vmul.f32 %v132, %v586
    %v933 = vmul.f32 %v133, %v590
    %v934 = vmul.f32 %v134, %v594
    %v935 = vmul.f32 %v135, %v598
    %v936 = vmul.f32 %v136, %v602
    %v937 = vmul.f32 %v137, %v606
    %v938 = vmul.f32 %v138, %v610
    %v939 = vmul.f32 %v139, %v614
    %v940 = vmul.f32 %v140, %v618
    %v941 = vmul.f32 %v141, %v622
    %v942 = vmul.f32 %v142, %v626
    %v943 = vmul.f32 %v143, %v630
    %v944 = vmul.f32 %v144, %v634
    %v945 = vmul.f32 %v145, %v638
    %v946 = vmul.f32 %v146, %v642
    %v947 = vmul.f32 %v147, %v646
    %v948 = vmul.f32 %v148, %v650
    %v949 = vmul.f32 %v149, %v654
    %v950 = vmul.f32 %v150, %v658
    %v951 = vmul.f32 %v151, %v662
    %v952 = vmul.f32 %v152, %v666
    %v953 = vmul.f32 %v153, %v670
    %v954 = vmul.f32 %v154, %v674
    %v955 = vmul.f32 %v155, %v678
    %v956 = vmul.f32 %v156, %v682
    %v957 = vmul.f32 %v157, %v686
    %v958 = vmul.f32 %v158, %v690
    %v959 = vmul.f32 %v159, %v694
    %v960 = vmul.f32 %v160, %v698
    %v961 = vmul.f32 %v161, %v702
    %v962 = vmul.f32 %v162, %v706
    %v963 = vadd.f32 %v835, %v836
    %v964 = vadd.f32 %v963, %v837
    %v965 = vadd.f32 %v964, %v838
    %v966 = vadd.f32 %v965, %v839
    %v967 = vadd.f32 %v966, %v840
    %v968 = vadd.f32 %v967, %v841
    %v969 = vadd.f32 %v968, %v842
    %v970 = vadd.f32 %v969, %v843
    %v971 = vadd.f32 %v970, %v844
    %v972 = vadd.f32 %v971, %v845
    %v973 = vadd.f32 %v972, %v846
    %v974 = vadd.f32 %v973, %v847
    %v975 = vadd.f32 %v974, %v848
    %v976 = vadd.f32 %v975, %v849
    %v977 = vadd.f32 %v976, %v850
    %v978 = vadd.f32 %v977, %v851
    %v979 = vadd.f32 %v978, %v852
    %v980 = vadd.f32 %v979, %v853
    %v981 = vadd.f32 %v980, %v854
    %v982 = vadd.f32 %v981, %v855
    %v983 = vadd.f32 %v982, %v856
    %v984 = vadd.f32 %v983, %v857
    %v985 = vadd.f32 %v984, %v858
    %v986 = vadd.f32 %v985, %v859
    %v987 = vadd.f32 %v986, %v860
    %v988 = vadd.f32 %v987, %v861
    %v989 = vadd.f32 %v988, %v862
    %v990 = vadd.f32 %v989, %v863
    %v991 = vadd.f32 %v990, %v864
    %v992 = vadd.f32 %v991, %v865
    %v993 = vadd.f32 %v992, %v866
    %v994 = vadd.f32 %v993, %v867
    %v995 = vadd.f32 %v994, %v868
    %v996 = vadd.f32 %v995, %v869
    %v997 = vadd.f32 %v996, %v870
    %v998 = vadd.f32 %v997, %v871
    %v999 = vadd.f32 %v998, %v872
    %v1000 = vadd.f32 %v999, %v873
    %v1001 = vadd.f32 %v1000, %v874
    %v1002 = vadd.f32 %v1001, %v875
    %v1003 = vadd.f32 %v1002, %v876
    %v1004 = vadd.f32 %v1003, %v877
    %v1005 = vadd.f32 %v1004, %v878
    %v1006 = vadd.f32 %v1005, %v879
    %v1007 = vadd.f32 %v1006, %v880
    %v1008 = vadd.f32 %v1007, %v881
    %v1009 = vadd.f32 %v1008, %v882
    %v1010 = vadd.f32 %v1009, %v883
    %v1011 = vadd.f32 %v1010, %v884
    %v1012 = vadd.f32 %v1011, %v885
    %v1013 = vadd.f32 %v1012, %v886
    %v1014 = vadd.f32 %v1013, %v887
    %v1015 = vadd.f32 %v1014, %v888
    %v1016 = vadd.f32 %v1015, %v889
    %v1017 = vadd.f32 %v1016, %v890
    %v1018 = vadd.f32 %v1017, %v891
    %v1019 = vadd.f32 %v1018, %v892
    %v1020 = vadd.f32 %v1019, %v893
    %v1021 = vadd.f32 %v1020, %v894
    %v1022 = vadd.f32 %v1021, %v895
    %v1023 = vadd.f32 %v1022, %v896
    %v1024 = vadd.f32 %v1023, %v897
    %v1025 = vadd.f32 %v1024, %v898
    %v1026 = vadd.f32 %v1025, %v899
    %v1027 = vadd.f32 %v1026, %v900
    %v1028 = vadd.f32 %v1027, %v901
    %v1029 = vadd.f32 %v1028, %v902
    %v1030 = vadd.f32 %v1029, %v903
    %v1031 = vadd.f32 %v1030, %v904
    %v1032 = vadd.f32 %v1031, %v905
    %v1033 = vadd.f32 %v1032, %v906
    %v1034 = vadd.f32 %v1033, %v907
    %v1035 = vadd.f32 %v1034, %v908
    %v1036 = vadd.f32 %v1035, %v909
    %v1037 = vadd.f32 %v1036, %v910
    %v1038 = vadd.f32 %v1037, %v911
    %v1039 = vadd.f32 %v1038, %v912
    %v1040 = vadd.f32 %v1039, %v913
    %v1041 = vadd.f32 %v1040, %v914
    %v1042 = vadd.f32 %v1041, %v915
    %v1043 = vadd.f32 %v1042, %v916
    %v1044 = vadd.f32 %v1043, %v917
    %v1045 = vadd.f32 %v1044, %v918
    %v1046 = vadd.f32 %v1045, %v919
    %v1047 = vadd.f32 %v1046, %v920
    %v1048 = vadd.f32 %v1047, %v921
    %v1049 = vadd.f32 %v1048, %v922
    %v1050 = vadd.f32 %v1049, %v923
    %v1051 = vadd.f32 %v1050, %v924
    %v1052 = vadd.f32 %v1051, %v925
    %v1053 = vadd.f32 %v1052, %v926
    %v1054 = vadd.f32 %v1053, %v927
    %v1055 = vadd.f32 %v1054, %v928
    %v1056 = vadd.f32 %v1055, %v929
    %v1057 = vadd.f32 %v1056, %v930
    %v1058 = vadd.f32 %v1057, %v931
    %v1059 = vadd.f32 %v1058, %v932
    %v1060 = vadd.f32 %v1059, %v933
    %v1061 = vadd.f32 %v1060, %v934
    %v1062 = vadd.f32 %v1061, %v935
    %v1063 = vadd.f32 %v1062, %v936
    %v1064 = vadd.f32 %v1063, %v937
    %v1065 = vadd.f32 %v1064, %v938
    %v1066 = vadd.f32 %v1065, %v939
    %v1067 = vadd.f32 %v1066, %v940
    %v1068 = vadd.f32 %v1067, %v941
    %v1069 = vadd.f32 %v1068, %v942
    %v1070 = vadd.f32 %v1069, %v943
    %v1071 = vadd.f32 %v1070, %v944
    %v1072 = vadd.f32 %v1071, %v945
    %v1073 = vadd.f32 %v1072, %v946
    %v1074 = vadd.f32 %v1073, %v947
    %v1075 = vadd.f32 %v1074, %v948
    %v1076 = vadd.f32 %v1075, %v949
    %v1077 = vadd.f32 %v1076, %v950
    %v1078 = vadd.f32 %v1077, %v951
    %v1079 = vadd.f32 %v1078, %v952
    %v1080 = vadd.f32 %v1079, %v953
    %v1081 = vadd.f32 %v1080, %v954
    %v1082 = vadd.f32 %v1081, %v955
    %v1083 = vadd.f32 %v1082, %v956
    %v1084 = vadd.f32 %v1083, %v957
    %v1085 = vadd.f32 %v1084, %v958
    %v1086 = vadd.f32 %v1085, %v959
    %v1087 = vadd.f32 %v1086, %v960
    %v1088 = vadd.f32 %v1087, %v961
    %v1089 = vadd.f32 %v1088, %v962
    %1090 = vadd.xlane.f32.xlu0 %v1089
    %v1091 = vpop.xlane.xlu0 %1090
    %v1092 = vlaneseq
    %v1093 = vand.u32 %v1092, 127
    %vm1094 = vcmp.eq.s32.totalorder %v1093, 0
    %v1095 = vsel %vm1094, 1.0, -1.0
    %v1096 = vmul.f32 %v1091, %v1095
    %v1097 = vsub.f32 0.0, %v1096
    %v1098 = vmul.f32 %v1097, 1.442695
    %v1099 = vpow.pop %v1098
    %v1100 = vadd.f32 %v1099, 1.0
    %v1101 = vrcp.pop %v1100
    %v1102 = vmul.f32 1.0, %v1101
    %vm1103 = vcmask 15360
    %1104 = vst.msk [vmem:[%s2] sm:$0xff] %vm1103, %v1102
    // Predicated region
    $region18: #{tpu_custom_call.1} parent=1 // pred_check
      _
    $region19: #{tpu_custom_call.1} parent=1 // pred_check_branch
      %1106 = sbr.rel (0) target = $region21
    $region20: #{tpu_custom_call.1} parent=1 // pred_region
      _
    $region21: #{tpu_custom_call.1} parent=1 // pred_fallthru
      _
    // Predicated region
    $region22: #{tpu_custom_call.1} parent=1 // pred_check
      _
    $region23: #{tpu_custom_call.1} parent=1 // pred_check_branch
      %1108 = sbr.rel (0) target = $region25
    $region24: #{tpu_custom_call.1} parent=1 // pred_region
      _
    $region25: #{tpu_custom_call.1} parent=1 // pred_fallthru
      _
    %1109 = vsyncpa [#allocation3], 1
    %1110 = vsyncpa [#allocation5], 1

</llo_original>
